<compile_context>
chip_gen: v6e
topology: v6e:2x2x1
jax: 0.10.0
libtpu: 0.0.40
codegen_flags: <defaults>
</compile_context>

<pallas_src>
import functools

import jax
import jax.numpy as jnp
from jax.experimental import pallas as pl
from jax.experimental.pallas import tpu as pltpu


def _round_up(x, m):
    return ((x + m - 1) // m) * m


def _round_down(x, m):
    return (x // m) * m


def _cdiv(a, b):
    return (a + b - 1) // b


def _log_sigmoid(x):
    # numerically stable: logsigmoid(x) = min(x, 0) - log1p(exp(-|x|))
    return jnp.minimum(x, 0.0) - jnp.log1p(jnp.exp(-jnp.abs(x)))


def _vmem_budget_bytes():
    """~3/4 of physical VMEM: ~48 MiB on v7x (64 MiB), ~96 MiB on v5e/v6e (128 MiB)."""
    cap = 64 * 1024 * 1024
    try:
        cap = int(pltpu.get_tpu_info().vmem_capacity_bytes)
    except Exception:
        pass
    return max(16 * 1024 * 1024, (cap * 3) // 4)


def _tile_rows(batch, bytes_per_row, fixed_bytes, budget, max_rows):
    """Largest multiple-of-8 batch tile whose double-buffered working set fits in
    ~half the VMEM budget, capped so the batch splits into >= 2 'parallel' grid
    tiles when B > 8 (v7x shards the parallel axis over its 2 TensorCores)."""
    if batch <= 8:
        return batch                       # one full-batch block (== array dim, exempt)
    avail = max((budget // 2) - fixed_bytes, 8 * bytes_per_row)
    cap = max(8, min(avail // max(bytes_per_row, 1), max_rows))
    two_tiles = max(8, _round_up(_cdiv(batch, 2), 8))   # guarantee >= 2 grid steps
    tb = min(_round_up(batch, 8), _round_down(cap, 8), two_tiles)
    return max(8, tb)


def _split_bf16x3(x):
    """Split a f32 table into 3 bf16 planes with hi+mid+lo ~= x to ~1 f32 ulp."""
    hi = x.astype(jnp.bfloat16)
    r1 = x - hi.astype(jnp.float32)
    mid = r1.astype(jnp.bfloat16)
    r2 = r1 - mid.astype(jnp.float32)
    lo = r2.astype(jnp.bfloat16)
    return jnp.stack([hi, mid, lo], axis=0)              # (3, V, E) bf16


# --------------------------------------------------------------------------
# Kernels
# --------------------------------------------------------------------------
def _stream_kernel(c_ref, o_ref, n_ref, loss_ref):
    """Streams pre-gathered (tb, E) center / outside / sum-of-negative rows."""
    tb = loss_ref.shape[0]
    c = c_ref[...]                                            # (tb, E)
    uovc = jnp.sum(o_ref[...] * c, axis=-1, keepdims=True)    # (tb, 1)
    ukvc = -jnp.sum(n_ref[...] * c, axis=-1, keepdims=True)   # (tb, 1)
    # Merged logsigmoid: one EUP pass over both terms (aligned sublane concat).
    x = jnp.concatenate([uovc, ukvc], axis=0)                 # (2*tb, 1)
    ls = _log_sigmoid(x)
    loss_ref[...] = ls[:tb] + ls[tb:]


def _fused_kernel(c_idx_ref, o_idx_ref, n_idx_ref, ec3_ref, eo3_ref, loss_ref):
    """Fused gather + K-reduction + loss.

    Index blocks (tb,1)/(tb,1)/(tb,K) int32 are the only per-batch HBM reads;
    the (3, V, E) bf16 tables are VMEM-resident (constant index_map).  Gathers
    are one-hot / counts matmuls on the MXU against the three bf16 planes,
    re-summed in f32 (exact row selection)."""
    tb = loss_ref.shape[0]
    _, voc, emb = ec3_ref.shape
    n_neg = n_idx_ref.shape[1]

    # One-hot selectors / negative-sample counts, built on the VPU.
    iota_v = jax.lax.broadcasted_iota(jnp.int32, (tb, voc), 1)
    c_oh = (iota_v == c_idx_ref[...]).astype(jnp.float32)     # (tb, V)
    o_oh = (iota_v == o_idx_ref[...]).astype(jnp.float32)     # (tb, V)
    n_idx = n_idx_ref[...]                                    # (tb, K)
    counts = (iota_v == n_idx[:, 0:1]).astype(jnp.float32)
    for k in range(1, n_neg):
        counts = counts + (iota_v == n_idx[:, k:k + 1]).astype(jnp.float32)
    # Cast to bf16 only for the MXU (values 0..K are exact in bf16); no bf16
    # VPU arithmetic anywhere (v5e has none).
    c_oh = c_oh.astype(jnp.bfloat16)
    o_oh = o_oh.astype(jnp.bfloat16)
    counts = counts.astype(jnp.bfloat16)

    c_e = jnp.zeros((tb, emb), jnp.float32)                   # Ec[center]
    o_e = jnp.zeros((tb, emb), jnp.float32)                   # Eo[outside]
    n_e = jnp.zeros((tb, emb), jnp.float32)                   # sum_k Eo[negative_k]
    for j in range(3):                                        # hi / mid / lo planes
        ec_j = ec3_ref[j]
        eo_j = eo3_ref[j]
        c_e = c_e + jnp.dot(c_oh, ec_j, preferred_element_type=jnp.float32)
        o_e = o_e + jnp.dot(o_oh, eo_j, preferred_element_type=jnp.float32)
        n_e = n_e + jnp.dot(counts, eo_j, preferred_element_type=jnp.float32)

    uovc = jnp.sum(o_e * c_e, axis=-1, keepdims=True)         # (tb, 1)
    ukvc = -jnp.sum(n_e * c_e, axis=-1, keepdims=True)        # (tb, 1)
    x = jnp.concatenate([uovc, ukvc], axis=0)                 # merged logsigmoid
    ls = _log_sigmoid(x)
    loss_ref[...] = ls[:tb] + ls[tb:]


# --------------------------------------------------------------------------
# Forward wrapper
# --------------------------------------------------------------------------
def skipgram_neg_forward(emb_center, emb_outside, center, outside, negative,
                         mode="auto"):
    """Full SkipgramNeg.forward.  mode: 'auto' | 'fused' | 'stream' (static)."""
    B, K = negative.shape
    V, E = emb_center.shape
    budget = _vmem_budget_bytes()

    fused_table_bytes = 2 * (3 * V * E * 2) * 2     # 2 tables, bf16x3, double-buffered
    if mode == "auto":
        mode = "fused" if (V <= 1024 and fused_table_bytes <= budget // 3) else "stream"

    c_idx = center.reshape(B, 1).astype(jnp.int32)
    o_idx = outside.reshape(B, 1).astype(jnp.int32)
    n_idx = negative.reshape(B, K).astype(jnp.int32)

    if mode == "fused":
        ec3 = _split_bf16x3(emb_center.astype(jnp.float32))   # (3, V, E) bf16
        eo3 = _split_bf16x3(emb_outside.astype(jnp.float32))  # (3, V, E) bf16

        per_row = 3 * V * 4 + 3 * V * 2 + 3 * E * 4 + (2 + K) * 4 * 2 + 8
        tb = _tile_rows(B, per_row, fused_table_bytes, budget, max_rows=4096)
        num_tiles = _cdiv(B, tb)

        cost = pl.CostEstimate(
            flops=9 * 2 * B * V * E + B * (4 * E + 16),
            transcendentals=4 * B,
            bytes_accessed=B * (2 + K) * 4 + 2 * 3 * V * E * 2 + B * 4,
        )
        per_row_loss = pl.pallas_call(
            _fused_kernel,
            out_shape=jax.ShapeDtypeStruct((B, 1), jnp.float32),
            grid=(num_tiles,),
            in_specs=[
                pl.BlockSpec((tb, 1), lambda i: (i, 0)),
                pl.BlockSpec((tb, 1), lambda i: (i, 0)),
                pl.BlockSpec((tb, K), lambda i: (i, 0)),
                pl.BlockSpec((3, V, E), lambda i: (0, 0, 0)),   # VMEM-resident table
                pl.BlockSpec((3, V, E), lambda i: (0, 0, 0)),   # VMEM-resident table
            ],
            out_specs=pl.BlockSpec((tb, 1), lambda i: (i, 0)),
            compiler_params=pltpu.CompilerParams(
                dimension_semantics=("parallel",),
                vmem_limit_bytes=int(budget),
            ),
            cost_estimate=cost,
        )(c_idx, o_idx, n_idx, ec3, eo3)
    else:
        # ---- gather glue (XLA) — large-vocab fallback ---------------------
        center_e = jnp.take(emb_center, c_idx[:, 0], axis=0).astype(jnp.float32)    # (B, E)
        outside_e = jnp.take(emb_outside, o_idx[:, 0], axis=0).astype(jnp.float32)  # (B, E)
        # Pre-reduce over K so the kernel never sees the (B, K, E) tensor.
        neg_sum = jnp.sum(jnp.take(emb_outside, n_idx, axis=0),
                          axis=1).astype(jnp.float32)                               # (B, E)

        per_row = 3 * E * 4 * 2 + 8                  # 3 f32 inputs, double-buffered
        tb = _tile_rows(B, per_row, 0, budget, max_rows=8192)
        num_tiles = _cdiv(B, tb)

        cost = pl.CostEstimate(
            flops=B * (4 * E + 16),
            transcendentals=4 * B,
            bytes_accessed=3 * B * E * 4 + B * 4,
        )
        per_row_loss = pl.pallas_call(
            _stream_kernel,
            out_shape=jax.ShapeDtypeStruct((B, 1), jnp.float32),
            grid=(num_tiles,),
            in_specs=[
                # Full-E blocks (exempt from the 128 rule) -> no jnp.pad round trip;
                # ragged last batch block handled by Pallas.
                pl.BlockSpec((tb, E), lambda i: (i, 0)),
                pl.BlockSpec((tb, E), lambda i: (i, 0)),
                pl.BlockSpec((tb, E), lambda i: (i, 0)),
            ],
            out_specs=pl.BlockSpec((tb, 1), lambda i: (i, 0)),
            compiler_params=pltpu.CompilerParams(
                dimension_semantics=("parallel",),
                vmem_limit_bytes=int(budget),
            ),
            cost_estimate=cost,
        )(center_e, outside_e, neg_sum)

    # Exact mean over the B per-row losses (padded/ragged rows never reach here).
    return -jnp.mean(per_row_loss)


def _reference_forward(emb_center, emb_outside, center, outside, negative):
    """Pure-JAX reference mirroring the PyTorch module exactly."""
    ce = jnp.take(emb_center, center, axis=0)      # (B, 1, E)
    oe = jnp.take(emb_outside, outside, axis=0)    # (B, 1, E)
    ne = jnp.take(emb_outside, negative, axis=0)   # (B, K, E)
    uovc = jnp.einsum("bie,bje->bij", oe, ce)[..., 0]          # (B, 1)
    ukvc = -jnp.einsum("bke,bje->bkj", ne, ce)[..., 0]         # (B, K)
    ukvc_sum = jnp.sum(ukvc, axis=1).reshape(-1, 1)            # (B, 1)
    loss = jax.nn.log_sigmoid(uovc) + jax.nn.log_sigmoid(ukvc_sum)
    return -jnp.mean(loss)


if __name__ == "__main__":
    voc_size, emb_size = 64, 128
    batch, n_neg = 8, 8

    key = jax.random.PRNGKey(0)
    k_ec, k_eo, k_c, k_o, k_n = jax.random.split(key, 5)

    # nn.Embedding default init: N(0, 1)
    emb_center = jax.random.normal(k_ec, (voc_size, emb_size), dtype=jnp.float32)
    emb_outside = jax.random.normal(k_eo, (voc_size, emb_size), dtype=jnp.float32)

    center = jax.random.randint(k_c, (batch, 1), 0, voc_size, dtype=jnp.int32)
    outside = jax.random.randint(k_o, (batch, 1), 0, voc_size, dtype=jnp.int32)
    negative = jax.random.randint(k_n, (batch, n_neg), 0, voc_size, dtype=jnp.int32)

    ref = _reference_forward(emb_center, emb_outside, center, outside, negative)

    # "auto" selects the fully fused (in-kernel gather) path for this small vocab.
    fused_fwd = jax.jit(functools.partial(skipgram_neg_forward, mode="auto"))
    stream_fwd = jax.jit(functools.partial(skipgram_neg_forward, mode="stream"))

    loss_fused = jax.block_until_ready(
        fused_fwd(emb_center, emb_outside, center, outside, negative))
    loss_stream = jax.block_until_ready(
        stream_fwd(emb_center, emb_outside, center, outside, negative))

    assert jnp.allclose(loss_fused, ref, atol=1e-4, rtol=1e-5), (loss_fused, ref)
    assert jnp.allclose(loss_stream, ref, atol=1e-4, rtol=1e-5), (loss_stream, ref)

    print("KERNEL_OK")
</pallas_src>

<mosaic_0001>
module attributes {stable_mosaic.version = 11 : i64} {
  func.func @_fused_kernel(%arg0: i32, %arg1: memref<8x1xi32, #tpu.memory_space<vmem>>, %arg2: memref<8x1xi32, #tpu.memory_space<vmem>>, %arg3: memref<8x8xi32, #tpu.memory_space<vmem>>, %arg4: memref<3x64x128xbf16, #tpu.memory_space<vmem>>, %arg5: memref<3x64x128xbf16, #tpu.memory_space<vmem>>, %arg6: memref<8x1xf32, #tpu.memory_space<vmem>>) attributes {dimension_semantics = [#tpu.dimension_semantics<parallel>], iteration_bounds = array<i64: 1>, scalar_prefetch = 0 : i64, scratch_operands = 0 : i64, tpu.core_type = #tpu.core_type<tc>, window_params = [{transform_indices = @transform_0, window_bounds = array<i64: 8, 1>}, {transform_indices = @transform_1, window_bounds = array<i64: 8, 1>}, {transform_indices = @transform_2, window_bounds = array<i64: 8, 8>}, {pipeline_mode = #tpu.pipeline_mode<synchronous>, transform_indices = @transform_3, window_bounds = array<i64: 3, 64, 128>}, {pipeline_mode = #tpu.pipeline_mode<synchronous>, transform_indices = @transform_4, window_bounds = array<i64: 3, 64, 128>}, {transform_indices = @transform_5, window_bounds = array<i64: 8, 1>}]} {
    %0 = tpu.iota {dimensions = array<i32: 1>} : vector<8x64xi32>
    %c0 = arith.constant 0 : index
    %c0_0 = arith.constant 0 : index
    %1 = vector.load %arg1[%c0, %c0_0] : memref<8x1xi32, #tpu.memory_space<vmem>>, vector<8x1xi32>
    %2 = vector.broadcast %1 : vector<8x1xi32> to vector<8x64xi32>
    %3 = arith.cmpi eq, %0, %2 : vector<8x64xi32>
    %4 = arith.extui %3 : vector<8x64xi1> to vector<8x64xi32>
    %5 = arith.sitofp %4 : vector<8x64xi32> to vector<8x64xf32>
    %c0_1 = arith.constant 0 : index
    %c0_2 = arith.constant 0 : index
    %6 = vector.load %arg2[%c0_1, %c0_2] : memref<8x1xi32, #tpu.memory_space<vmem>>, vector<8x1xi32>
    %7 = vector.broadcast %6 : vector<8x1xi32> to vector<8x64xi32>
    %8 = arith.cmpi eq, %0, %7 : vector<8x64xi32>
    %9 = arith.extui %8 : vector<8x64xi1> to vector<8x64xi32>
    %10 = arith.sitofp %9 : vector<8x64xi32> to vector<8x64xf32>
    %c0_3 = arith.constant 0 : index
    %c0_4 = arith.constant 0 : index
    %11 = vector.load %arg3[%c0_3, %c0_4] : memref<8x8xi32, #tpu.memory_space<vmem>>, vector<8x8xi32>
    %12 = vector.extract_strided_slice %11 {offsets = [0, 0], sizes = [8, 1], strides = [1, 1]} : vector<8x8xi32> to vector<8x1xi32>
    %13 = vector.broadcast %12 : vector<8x1xi32> to vector<8x64xi32>
    %14 = arith.cmpi eq, %0, %13 : vector<8x64xi32>
    %15 = arith.extui %14 : vector<8x64xi1> to vector<8x64xi32>
    %16 = arith.sitofp %15 : vector<8x64xi32> to vector<8x64xf32>
    %17 = vector.extract_strided_slice %11 {offsets = [0, 1], sizes = [8, 1], strides = [1, 1]} : vector<8x8xi32> to vector<8x1xi32>
    %18 = vector.broadcast %17 : vector<8x1xi32> to vector<8x64xi32>
    %19 = arith.cmpi eq, %0, %18 : vector<8x64xi32>
    %20 = arith.extui %19 : vector<8x64xi1> to vector<8x64xi32>
    %21 = arith.sitofp %20 : vector<8x64xi32> to vector<8x64xf32>
    %22 = arith.addf %16, %21 : vector<8x64xf32>
    %23 = vector.extract_strided_slice %11 {offsets = [0, 2], sizes = [8, 1], strides = [1, 1]} : vector<8x8xi32> to vector<8x1xi32>
    %24 = vector.broadcast %23 : vector<8x1xi32> to vector<8x64xi32>
    %25 = arith.cmpi eq, %0, %24 : vector<8x64xi32>
    %26 = arith.extui %25 : vector<8x64xi1> to vector<8x64xi32>
    %27 = arith.sitofp %26 : vector<8x64xi32> to vector<8x64xf32>
    %28 = arith.addf %22, %27 : vector<8x64xf32>
    %29 = vector.extract_strided_slice %11 {offsets = [0, 3], sizes = [8, 1], strides = [1, 1]} : vector<8x8xi32> to vector<8x1xi32>
    %30 = vector.broadcast %29 : vector<8x1xi32> to vector<8x64xi32>
    %31 = arith.cmpi eq, %0, %30 : vector<8x64xi32>
    %32 = arith.extui %31 : vector<8x64xi1> to vector<8x64xi32>
    %33 = arith.sitofp %32 : vector<8x64xi32> to vector<8x64xf32>
    %34 = arith.addf %28, %33 : vector<8x64xf32>
    %35 = vector.extract_strided_slice %11 {offsets = [0, 4], sizes = [8, 1], strides = [1, 1]} : vector<8x8xi32> to vector<8x1xi32>
    %36 = vector.broadcast %35 : vector<8x1xi32> to vector<8x64xi32>
    %37 = arith.cmpi eq, %0, %36 : vector<8x64xi32>
    %38 = arith.extui %37 : vector<8x64xi1> to vector<8x64xi32>
    %39 = arith.sitofp %38 : vector<8x64xi32> to vector<8x64xf32>
    %40 = arith.addf %34, %39 : vector<8x64xf32>
    %41 = vector.extract_strided_slice %11 {offsets = [0, 5], sizes = [8, 1], strides = [1, 1]} : vector<8x8xi32> to vector<8x1xi32>
    %42 = vector.broadcast %41 : vector<8x1xi32> to vector<8x64xi32>
    %43 = arith.cmpi eq, %0, %42 : vector<8x64xi32>
    %44 = arith.extui %43 : vector<8x64xi1> to vector<8x64xi32>
    %45 = arith.sitofp %44 : vector<8x64xi32> to vector<8x64xf32>
    %46 = arith.addf %40, %45 : vector<8x64xf32>
    %47 = vector.extract_strided_slice %11 {offsets = [0, 6], sizes = [8, 1], strides = [1, 1]} : vector<8x8xi32> to vector<8x1xi32>
    %48 = vector.broadcast %47 : vector<8x1xi32> to vector<8x64xi32>
    %49 = arith.cmpi eq, %0, %48 : vector<8x64xi32>
    %50 = arith.extui %49 : vector<8x64xi1> to vector<8x64xi32>
    %51 = arith.sitofp %50 : vector<8x64xi32> to vector<8x64xf32>
    %52 = arith.addf %46, %51 : vector<8x64xf32>
    %53 = vector.extract_strided_slice %11 {offsets = [0, 7], sizes = [8, 1], strides = [1, 1]} : vector<8x8xi32> to vector<8x1xi32>
    %54 = vector.broadcast %53 : vector<8x1xi32> to vector<8x64xi32>
    %55 = arith.cmpi eq, %0, %54 : vector<8x64xi32>
    %56 = arith.extui %55 : vector<8x64xi1> to vector<8x64xi32>
    %57 = arith.sitofp %56 : vector<8x64xi32> to vector<8x64xf32>
    %58 = arith.addf %52, %57 : vector<8x64xf32>
    %59 = arith.truncf %5 : vector<8x64xf32> to vector<8x64xbf16>
    %60 = arith.truncf %10 : vector<8x64xf32> to vector<8x64xbf16>
    %61 = arith.truncf %58 : vector<8x64xf32> to vector<8x64xbf16>
    %cst = arith.constant 0.000000e+00 : f32
    %62 = vector.broadcast %cst : f32 to vector<8x128xf32>
    %cst_5 = arith.constant 0.000000e+00 : f32
    %63 = vector.broadcast %cst_5 : f32 to vector<8x128xf32>
    %cst_6 = arith.constant 0.000000e+00 : f32
    %64 = vector.broadcast %cst_6 : f32 to vector<8x128xf32>
    %c0_7 = arith.constant 0 : index
    %c0_8 = arith.constant 0 : index
    %c0_9 = arith.constant 0 : index
    %65 = vector.load %arg4[%c0_7, %c0_8, %c0_9] : memref<3x64x128xbf16, #tpu.memory_space<vmem>>, vector<1x64x128xbf16>
    %66 = vector.shape_cast %65 : vector<1x64x128xbf16> to vector<64x128xbf16>
    %c0_10 = arith.constant 0 : index
    %c0_11 = arith.constant 0 : index
    %c0_12 = arith.constant 0 : index
    %67 = vector.load %arg5[%c0_10, %c0_11, %c0_12] : memref<3x64x128xbf16, #tpu.memory_space<vmem>>, vector<1x64x128xbf16>
    %68 = vector.shape_cast %67 : vector<1x64x128xbf16> to vector<64x128xbf16>
    %cst_13 = arith.constant dense<0.000000e+00> : vector<8x128xf32>
    %69 = tpu.matmul %59, %66, %cst_13 {dimension_numbers = #tpu.dot_dimension_numbers<[1], [0], [0], [1], [0, 0, 1, 1], [], []>} : vector<8x64xbf16>, vector<64x128xbf16>, vector<8x128xf32> -> vector<8x128xf32>
    %70 = arith.addf %62, %69 : vector<8x128xf32>
    %cst_14 = arith.constant dense<0.000000e+00> : vector<8x128xf32>
    %71 = tpu.matmul %60, %68, %cst_14 {dimension_numbers = #tpu.dot_dimension_numbers<[1], [0], [0], [1], [0, 0, 1, 1], [], []>} : vector<8x64xbf16>, vector<64x128xbf16>, vector<8x128xf32> -> vector<8x128xf32>
    %72 = arith.addf %63, %71 : vector<8x128xf32>
    %cst_15 = arith.constant dense<0.000000e+00> : vector<8x128xf32>
    %73 = tpu.matmul %61, %68, %cst_15 {dimension_numbers = #tpu.dot_dimension_numbers<[1], [0], [0], [1], [0, 0, 1, 1], [], []>} : vector<8x64xbf16>, vector<64x128xbf16>, vector<8x128xf32> -> vector<8x128xf32>
    %74 = arith.addf %64, %73 : vector<8x128xf32>
    %c1 = arith.constant 1 : index
    %c0_16 = arith.constant 0 : index
    %c0_17 = arith.constant 0 : index
    %75 = vector.load %arg4[%c1, %c0_16, %c0_17] : memref<3x64x128xbf16, #tpu.memory_space<vmem>>, vector<1x64x128xbf16>
    %76 = vector.shape_cast %75 : vector<1x64x128xbf16> to vector<64x128xbf16>
    %c1_18 = arith.constant 1 : index
    %c0_19 = arith.constant 0 : index
    %c0_20 = arith.constant 0 : index
    %77 = vector.load %arg5[%c1_18, %c0_19, %c0_20] : memref<3x64x128xbf16, #tpu.memory_space<vmem>>, vector<1x64x128xbf16>
    %78 = vector.shape_cast %77 : vector<1x64x128xbf16> to vector<64x128xbf16>
    %cst_21 = arith.constant dense<0.000000e+00> : vector<8x128xf32>
    %79 = tpu.matmul %59, %76, %cst_21 {dimension_numbers = #tpu.dot_dimension_numbers<[1], [0], [0], [1], [0, 0, 1, 1], [], []>} : vector<8x64xbf16>, vector<64x128xbf16>, vector<8x128xf32> -> vector<8x128xf32>
    %80 = arith.addf %70, %79 : vector<8x128xf32>
    %cst_22 = arith.constant dense<0.000000e+00> : vector<8x128xf32>
    %81 = tpu.matmul %60, %78, %cst_22 {dimension_numbers = #tpu.dot_dimension_numbers<[1], [0], [0], [1], [0, 0, 1, 1], [], []>} : vector<8x64xbf16>, vector<64x128xbf16>, vector<8x128xf32> -> vector<8x128xf32>
    %82 = arith.addf %72, %81 : vector<8x128xf32>
    %cst_23 = arith.constant dense<0.000000e+00> : vector<8x128xf32>
    %83 = tpu.matmul %61, %78, %cst_23 {dimension_numbers = #tpu.dot_dimension_numbers<[1], [0], [0], [1], [0, 0, 1, 1], [], []>} : vector<8x64xbf16>, vector<64x128xbf16>, vector<8x128xf32> -> vector<8x128xf32>
    %84 = arith.addf %74, %83 : vector<8x128xf32>
    %c2 = arith.constant 2 : index
    %c0_24 = arith.constant 0 : index
    %c0_25 = arith.constant 0 : index
    %85 = vector.load %arg4[%c2, %c0_24, %c0_25] : memref<3x64x128xbf16, #tpu.memory_space<vmem>>, vector<1x64x128xbf16>
    %86 = vector.shape_cast %85 : vector<1x64x128xbf16> to vector<64x128xbf16>
    %c2_26 = arith.constant 2 : index
    %c0_27 = arith.constant 0 : index
    %c0_28 = arith.constant 0 : index
    %87 = vector.load %arg5[%c2_26, %c0_27, %c0_28] : memref<3x64x128xbf16, #tpu.memory_space<vmem>>, vector<1x64x128xbf16>
    %88 = vector.shape_cast %87 : vector<1x64x128xbf16> to vector<64x128xbf16>
    %cst_29 = arith.constant dense<0.000000e+00> : vector<8x128xf32>
    %89 = tpu.matmul %59, %86, %cst_29 {dimension_numbers = #tpu.dot_dimension_numbers<[1], [0], [0], [1], [0, 0, 1, 1], [], []>} : vector<8x64xbf16>, vector<64x128xbf16>, vector<8x128xf32> -> vector<8x128xf32>
    %90 = arith.addf %80, %89 : vector<8x128xf32>
    %cst_30 = arith.constant dense<0.000000e+00> : vector<8x128xf32>
    %91 = tpu.matmul %60, %88, %cst_30 {dimension_numbers = #tpu.dot_dimension_numbers<[1], [0], [0], [1], [0, 0, 1, 1], [], []>} : vector<8x64xbf16>, vector<64x128xbf16>, vector<8x128xf32> -> vector<8x128xf32>
    %92 = arith.addf %82, %91 : vector<8x128xf32>
    %cst_31 = arith.constant dense<0.000000e+00> : vector<8x128xf32>
    %93 = tpu.matmul %61, %88, %cst_31 {dimension_numbers = #tpu.dot_dimension_numbers<[1], [0], [0], [1], [0, 0, 1, 1], [], []>} : vector<8x64xbf16>, vector<64x128xbf16>, vector<8x128xf32> -> vector<8x128xf32>
    %94 = arith.addf %84, %93 : vector<8x128xf32>
    %95 = arith.mulf %92, %90 : vector<8x128xf32>
    %cst_32 = arith.constant dense<0.000000e+00> : vector<8xf32>
    %96 = vector.multi_reduction <add>, %95, %cst_32 [1] : vector<8x128xf32> to vector<8xf32>
    %97 = vector.shape_cast %96 : vector<8xf32> to vector<8x1xf32>
    %98 = arith.mulf %94, %90 : vector<8x128xf32>
    %cst_33 = arith.constant dense<0.000000e+00> : vector<8xf32>
    %99 = vector.multi_reduction <add>, %98, %cst_33 [1] : vector<8x128xf32> to vector<8xf32>
    %100 = vector.shape_cast %99 : vector<8xf32> to vector<8x1xf32>
    %cst_34 = arith.constant 0.000000e+00 : f32
    %101 = vector.broadcast %cst_34 : f32 to vector<8x1xf32>
    %102 = arith.subf %101, %100 : vector<8x1xf32>
    %103 = tpu.concatenate %97, %102 in 0 : vector<8x1xf32>, vector<8x1xf32> -> vector<16x1xf32>
    %cst_35 = arith.constant 0.000000e+00 : f32
    %104 = vector.broadcast %cst_35 : f32 to vector<16x1xf32>
    %105 = arith.minimumf %103, %104 : vector<16x1xf32>
    %106 = math.absf %103 : vector<16x1xf32>
    %cst_36 = arith.constant 0.000000e+00 : f32
    %107 = vector.broadcast %cst_36 : f32 to vector<16x1xf32>
    %108 = arith.subf %107, %106 : vector<16x1xf32>
    %109 = math.exp %108 : vector<16x1xf32>
    %110 = math.log1p %109 : vector<16x1xf32>
    %111 = arith.subf %105, %110 : vector<16x1xf32>
    %112 = vector.extract_strided_slice %111 {offsets = [0, 0], sizes = [8, 1], strides = [1, 1]} : vector<16x1xf32> to vector<8x1xf32>
    %113 = vector.extract_strided_slice %111 {offsets = [8, 0], sizes = [8, 1], strides = [1, 1]} : vector<16x1xf32> to vector<8x1xf32>
    %114 = arith.addf %112, %113 : vector<8x1xf32>
    %c0_37 = arith.constant 0 : index
    %c0_38 = arith.constant 0 : index
    %115 = vector.load %arg6[%c0_37, %c0_38] : memref<8x1xf32, #tpu.memory_space<vmem>>, vector<8x1xf32>
    tpu.vector_store %arg6[%c0_37, %c0_38], %114 {strides = array<i32>} : memref<8x1xf32, #tpu.memory_space<vmem>>, vector<8x1xf32>,
    return
  }
  func.func @transform_0(%arg0: i32) -> (i32, i32) {
    %c0_i32 = arith.constant 0 : i32
    %c0_i32_0 = arith.constant 0 : i32
    return %arg0, %c0_i32 : i32, i32
  }
  func.func @transform_1(%arg0: i32) -> (i32, i32) {
    %c0_i32 = arith.constant 0 : i32
    %c0_i32_0 = arith.constant 0 : i32
    return %arg0, %c0_i32 : i32, i32
  }
  func.func @transform_2(%arg0: i32) -> (i32, i32) {
    %c0_i32 = arith.constant 0 : i32
    %c0_i32_0 = arith.constant 0 : i32
    return %arg0, %c0_i32 : i32, i32
  }
  func.func @transform_3(%arg0: i32) -> (i32, i32, i32) {
    %c0_i32 = arith.constant 0 : i32
    %c0_i32_0 = arith.constant 0 : i32
    %c0_i32_1 = arith.constant 0 : i32
    %c0_i32_2 = arith.constant 0 : i32
    return %c0_i32, %c0_i32_0, %c0_i32_1 : i32, i32, i32
  }
  func.func @transform_4(%arg0: i32) -> (i32, i32, i32) {
    %c0_i32 = arith.constant 0 : i32
    %c0_i32_0 = arith.constant 0 : i32
    %c0_i32_1 = arith.constant 0 : i32
    %c0_i32_2 = arith.constant 0 : i32
    return %c0_i32, %c0_i32_0, %c0_i32_1 : i32, i32, i32
  }
  func.func @transform_5(%arg0: i32) -> (i32, i32) {
    %c0_i32 = arith.constant 0 : i32
    %c0_i32_0 = arith.constant 0 : i32
    return %arg0, %c0_i32 : i32, i32
  }
}

</mosaic_0001>

<llo_original>
// kernel: skipgram_neg_forward.1
$region0: #{skipgram_neg_forward.1}
  #allocation0 [shape = 'u32[]', space=smem, size = 0x4, offset = 0x4, fixed_abs, tag = 'smem constant byte address 0x4 - core index']
  #allocation1 [shape = 'u32[144,128]{1,0:T(1,128)}', space=vmem, size = 0x12000, scoped, tag = 'internal scratch']
  %s0 = inlined_call_operand.vmem [shape: s32[8,1], index: 0, kind: input, shape index: {}]
  %s1 = inlined_call_operand.vmem [shape: s32[8,1], index: 1, kind: input, shape index: {}]
  %s2 = inlined_call_operand.vmem [shape: s32[8,8], index: 2, kind: input, shape index: {}]
  %s3 = inlined_call_operand.vmem [shape: bf16[3,64,128], index: 3, kind: input, shape index: {}]
  %s4 = inlined_call_operand.vmem [shape: bf16[3,64,128], index: 4, kind: input, shape index: {}]
  %s5 = inlined_call_operand.vmem [shape: f32[8,1], index: 5, kind: output, shape index: {}]
  %s6 = sld [smem:[#allocation0]]
  $region30: #{skipgram_neg_forward.1} parent=0
    _
  %s8 = ssub.s32 1, %s6
  %s9 = scalar_select 0, %s8, %s6
  // Predicated region
  $region2: #{skipgram_neg_forward.1} parent=0 // pred_check
    _
  $region3: #{skipgram_neg_forward.1} parent=0 // pred_check_branch
    %11 = sbr.rel (0) target = $region5
  $region4: #{skipgram_neg_forward.1} parent=0 // pred_region
    _
  $region5: #{skipgram_neg_forward.1} parent=0 // pred_fallthru
    _
  // Predicated region
  $region6: #{skipgram_neg_forward.1} parent=0 // pred_check
    _
  $region7: #{skipgram_neg_forward.1} parent=0 // pred_check_branch
    %13 = sbr.rel (0) target = $region9
  $region8: #{skipgram_neg_forward.1} parent=0 // pred_region
    _
  $region9: #{skipgram_neg_forward.1} parent=0 // pred_fallthru
    _
  // Predicated region
  $region10: #{skipgram_neg_forward.1} parent=0 // pred_check
    _
  $region11: #{skipgram_neg_forward.1} parent=0 // pred_check_branch
    %15 = sbr.rel (0) target = $region13
  $region12: #{skipgram_neg_forward.1} parent=0 // pred_region
    _
  $region13: #{skipgram_neg_forward.1} parent=0 // pred_fallthru
    _
  // Predicated region
  $region14: #{skipgram_neg_forward.1} parent=0 // pred_check
    _
  $region15: #{skipgram_neg_forward.1} parent=0 // pred_check_branch
    %17 = sbr.rel (0) target = $region17
  $region16: #{skipgram_neg_forward.1} parent=0 // pred_region
    _
  $region17: #{skipgram_neg_forward.1} parent=0 // pred_fallthru
    _
  // Predicated region
  $region18: #{skipgram_neg_forward.1} parent=0 // pred_check
    _
  $region19: #{skipgram_neg_forward.1} parent=0 // pred_check_branch
    %19 = sbr.rel (0) target = $region21
  $region20: #{skipgram_neg_forward.1} parent=0 // pred_region
    _
  $region21: #{skipgram_neg_forward.1} parent=0 // pred_fallthru
    _
  %v21 = vlaneseq
  %v22 = vand.u32 %v21, 127
  %v23 = vld [vmem:[%s0] sm:$0xff]
  %24 = vset.pattern.permute.xlu0 0
  %25 = vperm.xlu0 %24, %v23
  %v26 = vpop.permute.xlu0 %25
  %vm27 = vcmp.eq.s32.totalorder %v22, %v26
  %v28 = vld [vmem:[%s1] sm:$0xff]
  %29 = vset.pattern.permute.xlu0 0
  %30 = vperm.xlu0 %29, %v28
  %v31 = vpop.permute.xlu0 %30
  %vm32 = vcmp.eq.s32.totalorder %v22, %v31
  %v33 = vld [vmem:[%s2] sm:$0xff]
  %34 = vset.pattern.permute.xlu0 0
  %35 = vperm.xlu0 %34, %v33
  %v36 = vpop.permute.xlu0 %35
  %vm37 = vcmp.eq.s32.totalorder %v22, %v36
  %v38 = vsel %vm37, 1, 0
  %v39 = vcvt.s32.f32 %v38
  %40 = vset.pattern.permute.xlu0 1
  %41 = vperm.xlu0 %40, %v33
  %v42 = vpop.permute.xlu0 %41
  %vm43 = vcmp.eq.s32.totalorder %v22, %v42
  %v44 = vsel %vm43, 1, 0
  %v45 = vcvt.s32.f32 %v44
  %v46 = vadd.f32 %v39, %v45
  %47 = vset.pattern.permute.xlu0 2
  %48 = vperm.xlu0 %47, %v33
  %v49 = vpop.permute.xlu0 %48
  %vm50 = vcmp.eq.s32.totalorder %v22, %v49
  %v51 = vsel %vm50, 1, 0
  %v52 = vcvt.s32.f32 %v51
  %v53 = vadd.f32 %v46, %v52
  %54 = vset.pattern.permute.xlu0 3
  %55 = vperm.xlu0 %54, %v33
  %v56 = vpop.permute.xlu0 %55
  %vm57 = vcmp.eq.s32.totalorder %v22, %v56
  %v58 = vsel %vm57, 1, 0
  %v59 = vcvt.s32.f32 %v58
  %v60 = vadd.f32 %v53, %v59
  %61 = vset.pattern.permute.xlu0 4
  %62 = vperm.xlu0 %61, %v33
  %v63 = vpop.permute.xlu0 %62
  %vm64 = vcmp.eq.s32.totalorder %v22, %v63
  %v65 = vsel %vm64, 1, 0
  %v66 = vcvt.s32.f32 %v65
  %v67 = vadd.f32 %v60, %v66
  %68 = vset.pattern.permute.xlu0 5
  %69 = vperm.xlu0 %68, %v33
  %v70 = vpop.permute.xlu0 %69
  %vm71 = vcmp.eq.s32.totalorder %v22, %v70
  %v72 = vsel %vm71, 1, 0
  %v73 = vcvt.s32.f32 %v72
  %v74 = vadd.f32 %v67, %v73
  %75 = vset.pattern.permute.xlu0 6
  %76 = vperm.xlu0 %75, %v33
  %v77 = vpop.permute.xlu0 %76
  %vm78 = vcmp.eq.s32.totalorder %v22, %v77
  %v79 = vsel %vm78, 1, 0
  %v80 = vcvt.s32.f32 %v79
  %v81 = vadd.f32 %v74, %v80
  %82 = vset.pattern.permute.xlu0 7
  %83 = vperm.xlu0 %82, %v33
  %v84 = vpop.permute.xlu0 %83
  %vm85 = vcmp.eq.s32.totalorder %v22, %v84
  %v86 = vsel %vm85, 1, 0
  %v87 = vcvt.s32.f32 %v86
  %v88 = vadd.f32 %v81, %v87
  %v89 = vsel %vm27, 1, 0
  %v90 = vcvt.s32.f32 %v89
  %v91 = vpack.c.bf16 %v90, %v90
  %v92 = vsel %vm32, 1, 0
  %v93 = vcvt.s32.f32 %v92
  %v94 = vpack.c.bf16 %v93, %v93
  %v95 = vpack.c.bf16 %v88, %v88
  %v96 = vld [vmem:[%s3] sm:$0xf]
  %v97 = vld [vmem:[%s3 + $0x4] sm:$0xf]
  %v98 = vld [vmem:[%s3 + $0x8] sm:$0xf]
  %v99 = vld [vmem:[%s3 + $0xc] sm:$0xf]
  %v100 = vld [vmem:[%s3 + $0x10] sm:$0xf]
  %v101 = vld [vmem:[%s3 + $0x14] sm:$0xf]
  %v102 = vld [vmem:[%s3 + $0x18] sm:$0xf]
  %v103 = vld [vmem:[%s3 + $0x1c] sm:$0xf]
  %v104 = vld [vmem:[%s4] sm:$0xf]
  %v105 = vld [vmem:[%s4 + $0x4] sm:$0xf]
  %v106 = vld [vmem:[%s4 + $0x8] sm:$0xf]
  %v107 = vld [vmem:[%s4 + $0xc] sm:$0xf]
  %v108 = vld [vmem:[%s4 + $0x10] sm:$0xf]
  %v109 = vld [vmem:[%s4 + $0x14] sm:$0xf]
  %v110 = vld [vmem:[%s4 + $0x18] sm:$0xf]
  %v111 = vld [vmem:[%s4 + $0x1c] sm:$0xf]
  %s112 = scalar_lea.vmem %s3, 32
  %v113 = vld [vmem:[%s112] sm:$0xf]
  %v114 = vld [vmem:[%s112 + $0x4] sm:$0xf]
  %v115 = vld [vmem:[%s112 + $0x8] sm:$0xf]
  %v116 = vld [vmem:[%s112 + $0xc] sm:$0xf]
  %v117 = vld [vmem:[%s112 + $0x10] sm:$0xf]
  %v118 = vld [vmem:[%s112 + $0x14] sm:$0xf]
  %v119 = vld [vmem:[%s112 + $0x18] sm:$0xf]
  %v120 = vld [vmem:[%s112 + $0x1c] sm:$0xf]
  %s121 = scalar_lea.vmem %s4, 32
  %v122 = vld [vmem:[%s121] sm:$0xf]
  %v123 = vld [vmem:[%s121 + $0x4] sm:$0xf]
  %v124 = vld [vmem:[%s121 + $0x8] sm:$0xf]
  %v125 = vld [vmem:[%s121 + $0xc] sm:$0xf]
  %v126 = vld [vmem:[%s121 + $0x10] sm:$0xf]
  %v127 = vld [vmem:[%s121 + $0x14] sm:$0xf]
  %v128 = vld [vmem:[%s121 + $0x18] sm:$0xf]
  %v129 = vld [vmem:[%s121 + $0x1c] sm:$0xf]
  %v138 = vunpack.c.l.b16 %v113
  %v139 = vunpack.c.l.b16 %v114
  %v140 = vunpack.c.l.b16 %v115
  %v141 = vunpack.c.l.b16 %v116
  %v142 = vunpack.c.l.b16 %v117
  %v143 = vunpack.c.l.b16 %v118
  %v144 = vunpack.c.l.b16 %v119
  %v145 = vunpack.c.l.b16 %v120
  %v146 = vpack.c.b16 %v139, %v138
  %v147 = vpack.c.b16 %v141, %v140
  %v148 = vpack.c.b16 %v143, %v142
  %v149 = vpack.c.b16 %v145, %v144
  %vm154 = vcmask 523264
  %v156 = vsel %vm154, %v91, 0
  %158 = vmatprep.subr.bf16.mxu0 0
  %159 = vmatpush1.bf16.msra.mxu0 0
  %160 = vmatprep.subr.bf16.mxu0 0
  %161 = vmatpush1.bf16.msra.mxu0 0
  %162 = vmatprep.subr.bf16.mxu0 0
  %163 = vmatpush1.bf16.msra.mxu0 0
  %164 = vmatprep.subr.bf16.mxu0 0
  %165 = vmatpush1.bf16.msra.mxu0 0
  %166 = vmatprep.subr.bf16.mxu0 0
  %167 = vmatpush1.bf16.msra.mxu0 %v149
  %168 = vmatprep.subr.bf16.mxu0 0
  %169 = vmatpush1.bf16.msra.mxu0 %v148
  %170 = vmatprep.subr.bf16.mxu0 0
  %171 = vmatpush1.bf16.msra.mxu0 %v147
  %172 = vmatprep.subr.bf16.mxu0 0
  %173 = vmatpush1.bf16.msra.mxu0 %v146
  %174 = vmatprep.subr.bf16.mxu0 0
  %175 = vmatpush2.bf16.msra.mxu0 0
  %176 = vmatprep.subr.bf16.mxu0 0
  %177 = vmatpush2.bf16.msra.mxu0 0
  %178 = vmatprep.subr.bf16.mxu0 0
  %179 = vmatpush2.bf16.msra.mxu0 0
  %180 = vmatprep.subr.bf16.mxu0 0
  %181 = vmatpush2.bf16.msra.mxu0 0
  %182 = vmatprep.subr.bf16.mxu0 0
  %183 = vmatpush2.bf16.msra.mxu0 0
  %184 = vmatprep.subr.bf16.mxu0 0
  %185 = vmatpush2.bf16.msra.mxu0 0
  %186 = vmatprep.subr.bf16.mxu0 0
  %187 = vmatpush2.bf16.msra.mxu0 0
  %188 = vmatprep.subr.bf16.mxu0 0
  %189 = vmatpush2.bf16.msra.mxu0 0
  %190 = vmatprep.mubr.bf16.mxu0 0
  %191 = vmatmul.mubr.bf16.gmra.mxu0 %v156
  %v192 = vpop.f32.mrf.mxu0
  %v193 = vadd.f32 0.0, %v192
  %v194 = vpop.f32.mrf.mxu0
  %v195 = vpop.f32.mrf.mxu0
  %v196 = vpop.f32.mrf.mxu0
  %197 = vdwg.mxu0
  %v206 = vunpack.c.l.b16 %v96
  %v207 = vunpack.c.l.b16 %v97
  %v208 = vunpack.c.l.b16 %v98
  %v209 = vunpack.c.l.b16 %v99
  %v210 = vunpack.c.l.b16 %v100
  %v211 = vunpack.c.l.b16 %v101
  %v212 = vunpack.c.l.b16 %v102
  %v213 = vunpack.c.l.b16 %v103
  %v214 = vpack.c.b16 %v207, %v206
  %v215 = vpack.c.b16 %v209, %v208
  %v216 = vpack.c.b16 %v211, %v210
  %v217 = vpack.c.b16 %v213, %v212
  %222 = vmatprep.subr.bf16.mxu0 0
  %223 = vmatpush1.bf16.msra.mxu0 0
  %224 = vmatprep.subr.bf16.mxu0 0
  %225 = vmatpush1.bf16.msra.mxu0 0
  %226 = vmatprep.subr.bf16.mxu0 0
  %227 = vmatpush1.bf16.msra.mxu0 0
  %228 = vmatprep.subr.bf16.mxu0 0
  %229 = vmatpush1.bf16.msra.mxu0 0
  %230 = vmatprep.subr.bf16.mxu0 0
  %231 = vmatpush1.bf16.msra.mxu0 %v217
  %232 = vmatprep.subr.bf16.mxu0 0
  %233 = vmatpush1.bf16.msra.mxu0 %v216
  %234 = vmatprep.subr.bf16.mxu0 0
  %235 = vmatpush1.bf16.msra.mxu0 %v215
  %236 = vmatprep.subr.bf16.mxu0 0
  %237 = vmatpush1.bf16.msra.mxu0 %v214
  %238 = vmatprep.subr.bf16.mxu0 0
  %239 = vmatpush2.bf16.msra.mxu0 0
  %240 = vmatprep.subr.bf16.mxu0 0
  %241 = vmatpush2.bf16.msra.mxu0 0
  %242 = vmatprep.subr.bf16.mxu0 0
  %243 = vmatpush2.bf16.msra.mxu0 0
  %244 = vmatprep.subr.bf16.mxu0 0
  %245 = vmatpush2.bf16.msra.mxu0 0
  %246 = vmatprep.subr.bf16.mxu0 0
  %247 = vmatpush2.bf16.msra.mxu0 0
  %248 = vmatprep.subr.bf16.mxu0 0
  %249 = vmatpush2.bf16.msra.mxu0 0
  %250 = vmatprep.subr.bf16.mxu0 0
  %251 = vmatpush2.bf16.msra.mxu0 0
  %252 = vmatprep.subr.bf16.mxu0 0
  %253 = vmatpush2.bf16.msra.mxu0 0
  %254 = vmatprep.mubr.bf16.mxu0 0
  %255 = vmatmul.mubr.bf16.gmra.mxu0 %v156
  %v256 = vpop.f32.mrf.mxu0
  %v257 = vadd.f32 %v193, %v256
  %v258 = vpop.f32.mrf.mxu0
  %v259 = vpop.f32.mrf.mxu0
  %v260 = vpop.f32.mrf.mxu0
  %261 = vdwg.mxu0
  %v270 = vunpack.c.l.b16 %v122
  %v271 = vunpack.c.l.b16 %v123
  %v272 = vunpack.c.l.b16 %v124
  %v273 = vunpack.c.l.b16 %v125
  %v274 = vunpack.c.l.b16 %v126
  %v275 = vunpack.c.l.b16 %v127
  %v276 = vunpack.c.l.b16 %v128
  %v277 = vunpack.c.l.b16 %v129
  %v278 = vpack.c.b16 %v271, %v270
  %v279 = vpack.c.b16 %v273, %v272
  %v280 = vpack.c.b16 %v275, %v274
  %v281 = vpack.c.b16 %v277, %v276
  %v287 = vsel %vm154, %v94, 0
  %289 = vmatprep.subr.bf16.mxu0 0
  %290 = vmatpush1.bf16.msra.mxu0 0
  %291 = vmatprep.subr.bf16.mxu0 0
  %292 = vmatpush1.bf16.msra.mxu0 0
  %293 = vmatprep.subr.bf16.mxu0 0
  %294 = vmatpush1.bf16.msra.mxu0 0
  %295 = vmatprep.subr.bf16.mxu0 0
  %296 = vmatpush1.bf16.msra.mxu0 0
  %297 = vmatprep.subr.bf16.mxu0 0
  %298 = vmatpush1.bf16.msra.mxu0 %v281
  %299 = vmatprep.subr.bf16.mxu0 0
  %300 = vmatpush1.bf16.msra.mxu0 %v280
  %301 = vmatprep.subr.bf16.mxu0 0
  %302 = vmatpush1.bf16.msra.mxu0 %v279
  %303 = vmatprep.subr.bf16.mxu0 0
  %304 = vmatpush1.bf16.msra.mxu0 %v278
  %305 = vmatprep.subr.bf16.mxu0 0
  %306 = vmatpush2.bf16.msra.mxu0 0
  %307 = vmatprep.subr.bf16.mxu0 0
  %308 = vmatpush2.bf16.msra.mxu0 0
  %309 = vmatprep.subr.bf16.mxu0 0
  %310 = vmatpush2.bf16.msra.mxu0 0
  %311 = vmatprep.subr.bf16.mxu0 0
  %312 = vmatpush2.bf16.msra.mxu0 0
  %313 = vmatprep.subr.bf16.mxu0 0
  %314 = vmatpush2.bf16.msra.mxu0 0
  %315 = vmatprep.subr.bf16.mxu0 0
  %316 = vmatpush2.bf16.msra.mxu0 0
  %317 = vmatprep.subr.bf16.mxu0 0
  %318 = vmatpush2.bf16.msra.mxu0 0
  %319 = vmatprep.subr.bf16.mxu0 0
  %320 = vmatpush2.bf16.msra.mxu0 0
  %321 = vmatprep.mubr.bf16.mxu0 0
  %322 = vmatmul.mubr.bf16.gmra.mxu0 %v287
  %v323 = vpop.f32.mrf.mxu0
  %v324 = vadd.f32 0.0, %v323
  %v325 = vpop.f32.mrf.mxu0
  %v326 = vpop.f32.mrf.mxu0
  %v327 = vpop.f32.mrf.mxu0
  %328 = vdwg.mxu0
  %v337 = vunpack.c.l.b16 %v104
  %v338 = vunpack.c.l.b16 %v105
  %v339 = vunpack.c.l.b16 %v106
  %v340 = vunpack.c.l.b16 %v107
  %v341 = vunpack.c.l.b16 %v108
  %v342 = vunpack.c.l.b16 %v109
  %v343 = vunpack.c.l.b16 %v110
  %v344 = vunpack.c.l.b16 %v111
  %v345 = vpack.c.b16 %v338, %v337
  %v346 = vpack.c.b16 %v340, %v339
  %v347 = vpack.c.b16 %v342, %v341
  %v348 = vpack.c.b16 %v344, %v343
  %353 = vmatprep.subr.bf16.mxu0 0
  %354 = vmatpush1.bf16.msra.mxu0 0
  %355 = vmatprep.subr.bf16.mxu0 0
  %356 = vmatpush1.bf16.msra.mxu0 0
  %357 = vmatprep.subr.bf16.mxu0 0
  %358 = vmatpush1.bf16.msra.mxu0 0
  %359 = vmatprep.subr.bf16.mxu0 0
  %360 = vmatpush1.bf16.msra.mxu0 0
  %361 = vmatprep.subr.bf16.mxu0 0
  %362 = vmatpush1.bf16.msra.mxu0 %v348
  %363 = vmatprep.subr.bf16.mxu0 0
  %364 = vmatpush1.bf16.msra.mxu0 %v347
  %365 = vmatprep.subr.bf16.mxu0 0
  %366 = vmatpush1.bf16.msra.mxu0 %v346
  %367 = vmatprep.subr.bf16.mxu0 0
  %368 = vmatpush1.bf16.msra.mxu0 %v345
  %369 = vmatprep.subr.bf16.mxu0 0
  %370 = vmatpush2.bf16.msra.mxu0 0
  %371 = vmatprep.subr.bf16.mxu0 0
  %372 = vmatpush2.bf16.msra.mxu0 0
  %373 = vmatprep.subr.bf16.mxu0 0
  %374 = vmatpush2.bf16.msra.mxu0 0
  %375 = vmatprep.subr.bf16.mxu0 0
  %376 = vmatpush2.bf16.msra.mxu0 0
  %377 = vmatprep.subr.bf16.mxu0 0
  %378 = vmatpush2.bf16.msra.mxu0 0
  %379 = vmatprep.subr.bf16.mxu0 0
  %380 = vmatpush2.bf16.msra.mxu0 0
  %381 = vmatprep.subr.bf16.mxu0 0
  %382 = vmatpush2.bf16.msra.mxu0 0
  %383 = vmatprep.subr.bf16.mxu0 0
  %384 = vmatpush2.bf16.msra.mxu0 0
  %385 = vmatprep.mubr.bf16.mxu0 0
  %386 = vmatmul.mubr.bf16.gmra.mxu0 %v287
  %v387 = vpop.f32.mrf.mxu0
  %v388 = vadd.f32 %v324, %v387
  %v389 = vpop.f32.mrf.mxu0
  %v390 = vpop.f32.mrf.mxu0
  %v391 = vpop.f32.mrf.mxu0
  %392 = vdwg.mxu0
  %v394 = vsel %vm154, %v95, 0
  %396 = vmatprep.subr.bf16.mxu0 0
  %397 = vmatpush1.bf16.msra.mxu0 0
  %398 = vmatprep.subr.bf16.mxu0 0
  %399 = vmatpush1.bf16.msra.mxu0 0
  %400 = vmatprep.subr.bf16.mxu0 0
  %401 = vmatpush1.bf16.msra.mxu0 0
  %402 = vmatprep.subr.bf16.mxu0 0
  %403 = vmatpush1.bf16.msra.mxu0 0
  %404 = vmatprep.subr.bf16.mxu0 0
  %405 = vmatpush1.bf16.msra.mxu0 %v281
  %406 = vmatprep.subr.bf16.mxu0 0
  %407 = vmatpush1.bf16.msra.mxu0 %v280
  %408 = vmatprep.subr.bf16.mxu0 0
  %409 = vmatpush1.bf16.msra.mxu0 %v279
  %410 = vmatprep.subr.bf16.mxu0 0
  %411 = vmatpush1.bf16.msra.mxu0 %v278
  %412 = vmatprep.subr.bf16.mxu0 0
  %413 = vmatpush2.bf16.msra.mxu0 0
  %414 = vmatprep.subr.bf16.mxu0 0
  %415 = vmatpush2.bf16.msra.mxu0 0
  %416 = vmatprep.subr.bf16.mxu0 0
  %417 = vmatpush2.bf16.msra.mxu0 0
  %418 = vmatprep.subr.bf16.mxu0 0
  %419 = vmatpush2.bf16.msra.mxu0 0
  %420 = vmatprep.subr.bf16.mxu0 0
  %421 = vmatpush2.bf16.msra.mxu0 0
  %422 = vmatprep.subr.bf16.mxu0 0
  %423 = vmatpush2.bf16.msra.mxu0 0
  %424 = vmatprep.subr.bf16.mxu0 0
  %425 = vmatpush2.bf16.msra.mxu0 0
  %426 = vmatprep.subr.bf16.mxu0 0
  %427 = vmatpush2.bf16.msra.mxu0 0
  %428 = vmatprep.mubr.bf16.mxu0 0
  %429 = vmatmul.mubr.bf16.gmra.mxu0 %v394
  %v430 = vpop.f32.mrf.mxu0
  %v431 = vadd.f32 0.0, %v430
  %v432 = vpop.f32.mrf.mxu0
  %v433 = vpop.f32.mrf.mxu0
  %v434 = vpop.f32.mrf.mxu0
  %435 = vdwg.mxu0
  %436 = vmatprep.subr.bf16.mxu0 0
  %437 = vmatpush1.bf16.msra.mxu0 0
  %438 = vmatprep.subr.bf16.mxu0 0
  %439 = vmatpush1.bf16.msra.mxu0 0
  %440 = vmatprep.subr.bf16.mxu0 0
  %441 = vmatpush1.bf16.msra.mxu0 0
  %442 = vmatprep.subr.bf16.mxu0 0
  %443 = vmatpush1.bf16.msra.mxu0 0
  %444 = vmatprep.subr.bf16.mxu0 0
  %445 = vmatpush1.bf16.msra.mxu0 %v348
  %446 = vmatprep.subr.bf16.mxu0 0
  %447 = vmatpush1.bf16.msra.mxu0 %v347
  %448 = vmatprep.subr.bf16.mxu0 0
  %449 = vmatpush1.bf16.msra.mxu0 %v346
  %450 = vmatprep.subr.bf16.mxu0 0
  %451 = vmatpush1.bf16.msra.mxu0 %v345
  %452 = vmatprep.subr.bf16.mxu0 0
  %453 = vmatpush2.bf16.msra.mxu0 0
  %454 = vmatprep.subr.bf16.mxu0 0
  %455 = vmatpush2.bf16.msra.mxu0 0
  %456 = vmatprep.subr.bf16.mxu0 0
  %457 = vmatpush2.bf16.msra.mxu0 0
  %458 = vmatprep.subr.bf16.mxu0 0
  %459 = vmatpush2.bf16.msra.mxu0 0
  %460 = vmatprep.subr.bf16.mxu0 0
  %461 = vmatpush2.bf16.msra.mxu0 0
  %462 = vmatprep.subr.bf16.mxu0 0
  %463 = vmatpush2.bf16.msra.mxu0 0
  %464 = vmatprep.subr.bf16.mxu0 0
  %465 = vmatpush2.bf16.msra.mxu0 0
  %466 = vmatprep.subr.bf16.mxu0 0
  %467 = vmatpush2.bf16.msra.mxu0 0
  %468 = vmatprep.mubr.bf16.mxu0 0
  %469 = vmatmul.mubr.bf16.gmra.mxu0 %v394
  %v470 = vpop.f32.mrf.mxu0
  %v471 = vadd.f32 %v431, %v470
  %v472 = vpop.f32.mrf.mxu0
  %v473 = vpop.f32.mrf.mxu0
  %v474 = vpop.f32.mrf.mxu0
  %475 = vdwg.mxu0
  %s476 = scalar_lea.vmem %s3, 64
  %v477 = vld [vmem:[%s476] sm:$0xf]
  %v478 = vld [vmem:[%s476 + $0x4] sm:$0xf]
  %v479 = vld [vmem:[%s476 + $0x8] sm:$0xf]
  %v480 = vld [vmem:[%s476 + $0xc] sm:$0xf]
  %v481 = vld [vmem:[%s476 + $0x10] sm:$0xf]
  %v482 = vld [vmem:[%s476 + $0x14] sm:$0xf]
  %v483 = vld [vmem:[%s476 + $0x18] sm:$0xf]
  %v484 = vld [vmem:[%s476 + $0x1c] sm:$0xf]
  %s485 = scalar_lea.vmem %s4, 64
  %v486 = vld [vmem:[%s485] sm:$0xf]
  %v487 = vld [vmem:[%s485 + $0x4] sm:$0xf]
  %v488 = vld [vmem:[%s485 + $0x8] sm:$0xf]
  %v489 = vld [vmem:[%s485 + $0xc] sm:$0xf]
  %v490 = vld [vmem:[%s485 + $0x10] sm:$0xf]
  %v491 = vld [vmem:[%s485 + $0x14] sm:$0xf]
  %v492 = vld [vmem:[%s485 + $0x18] sm:$0xf]
  %v493 = vld [vmem:[%s485 + $0x1c] sm:$0xf]
  %v502 = vunpack.c.l.b16 %v477
  %v503 = vunpack.c.l.b16 %v478
  %v504 = vunpack.c.l.b16 %v479
  %v505 = vunpack.c.l.b16 %v480
  %v506 = vunpack.c.l.b16 %v481
  %v507 = vunpack.c.l.b16 %v482
  %v508 = vunpack.c.l.b16 %v483
  %v509 = vunpack.c.l.b16 %v484
  %v510 = vpack.c.b16 %v503, %v502
  %v511 = vpack.c.b16 %v505, %v504
  %v512 = vpack.c.b16 %v507, %v506
  %v513 = vpack.c.b16 %v509, %v508
  %518 = vmatprep.subr.bf16.mxu0 0
  %519 = vmatpush1.bf16.msra.mxu0 0
  %520 = vmatprep.subr.bf16.mxu0 0
  %521 = vmatpush1.bf16.msra.mxu0 0
  %522 = vmatprep.subr.bf16.mxu0 0
  %523 = vmatpush1.bf16.msra.mxu0 0
  %524 = vmatprep.subr.bf16.mxu0 0
  %525 = vmatpush1.bf16.msra.mxu0 0
  %526 = vmatprep.subr.bf16.mxu0 0
  %527 = vmatpush1.bf16.msra.mxu0 %v513
  %528 = vmatprep.subr.bf16.mxu0 0
  %529 = vmatpush1.bf16.msra.mxu0 %v512
  %530 = vmatprep.subr.bf16.mxu0 0
  %531 = vmatpush1.bf16.msra.mxu0 %v511
  %532 = vmatprep.subr.bf16.mxu0 0
  %533 = vmatpush1.bf16.msra.mxu0 %v510
  %534 = vmatprep.subr.bf16.mxu0 0
  %535 = vmatpush2.bf16.msra.mxu0 0
  %536 = vmatprep.subr.bf16.mxu0 0
  %537 = vmatpush2.bf16.msra.mxu0 0
  %538 = vmatprep.subr.bf16.mxu0 0
  %539 = vmatpush2.bf16.msra.mxu0 0
  %540 = vmatprep.subr.bf16.mxu0 0
  %541 = vmatpush2.bf16.msra.mxu0 0
  %542 = vmatprep.subr.bf16.mxu0 0
  %543 = vmatpush2.bf16.msra.mxu0 0
  %544 = vmatprep.subr.bf16.mxu0 0
  %545 = vmatpush2.bf16.msra.mxu0 0
  %546 = vmatprep.subr.bf16.mxu0 0
  %547 = vmatpush2.bf16.msra.mxu0 0
  %548 = vmatprep.subr.bf16.mxu0 0
  %549 = vmatpush2.bf16.msra.mxu0 0
  %550 = vmatprep.mubr.bf16.mxu0 0
  %551 = vmatmul.mubr.bf16.gmra.mxu0 %v156
  %v552 = vpop.f32.mrf.mxu0
  %v553 = vadd.f32 0.0, %v552
  %v554 = vpop.f32.mrf.mxu0
  %v555 = vpop.f32.mrf.mxu0
  %v556 = vpop.f32.mrf.mxu0
  %557 = vdwg.mxu0
  %v558 = vadd.f32 %v257, %v553
  %v567 = vunpack.c.l.b16 %v486
  %v568 = vunpack.c.l.b16 %v487
  %v569 = vunpack.c.l.b16 %v488
  %v570 = vunpack.c.l.b16 %v489
  %v571 = vunpack.c.l.b16 %v490
  %v572 = vunpack.c.l.b16 %v491
  %v573 = vunpack.c.l.b16 %v492
  %v574 = vunpack.c.l.b16 %v493
  %v575 = vpack.c.b16 %v568, %v567
  %v576 = vpack.c.b16 %v570, %v569
  %v577 = vpack.c.b16 %v572, %v571
  %v578 = vpack.c.b16 %v574, %v573
  %583 = vmatprep.subr.bf16.mxu0 0
  %584 = vmatpush1.bf16.msra.mxu0 0
  %585 = vmatprep.subr.bf16.mxu0 0
  %586 = vmatpush1.bf16.msra.mxu0 0
  %587 = vmatprep.subr.bf16.mxu0 0
  %588 = vmatpush1.bf16.msra.mxu0 0
  %589 = vmatprep.subr.bf16.mxu0 0
  %590 = vmatpush1.bf16.msra.mxu0 0
  %591 = vmatprep.subr.bf16.mxu0 0
  %592 = vmatpush1.bf16.msra.mxu0 %v578
  %593 = vmatprep.subr.bf16.mxu0 0
  %594 = vmatpush1.bf16.msra.mxu0 %v577
  %595 = vmatprep.subr.bf16.mxu0 0
  %596 = vmatpush1.bf16.msra.mxu0 %v576
  %597 = vmatprep.subr.bf16.mxu0 0
  %598 = vmatpush1.bf16.msra.mxu0 %v575
  %599 = vmatprep.subr.bf16.mxu0 0
  %600 = vmatpush2.bf16.msra.mxu0 0
  %601 = vmatprep.subr.bf16.mxu0 0
  %602 = vmatpush2.bf16.msra.mxu0 0
  %603 = vmatprep.subr.bf16.mxu0 0
  %604 = vmatpush2.bf16.msra.mxu0 0
  %605 = vmatprep.subr.bf16.mxu0 0
  %606 = vmatpush2.bf16.msra.mxu0 0
  %607 = vmatprep.subr.bf16.mxu0 0
  %608 = vmatpush2.bf16.msra.mxu0 0
  %609 = vmatprep.subr.bf16.mxu0 0
  %610 = vmatpush2.bf16.msra.mxu0 0
  %611 = vmatprep.subr.bf16.mxu0 0
  %612 = vmatpush2.bf16.msra.mxu0 0
  %613 = vmatprep.subr.bf16.mxu0 0
  %614 = vmatpush2.bf16.msra.mxu0 0
  %615 = vmatprep.mubr.bf16.mxu0 0
  %616 = vmatmul.mubr.bf16.gmra.mxu0 %v287
  %v617 = vpop.f32.mrf.mxu0
  %v618 = vadd.f32 0.0, %v617
  %v619 = vpop.f32.mrf.mxu0
  %v620 = vpop.f32.mrf.mxu0
  %v621 = vpop.f32.mrf.mxu0
  %622 = vdwg.mxu0
  %v623 = vadd.f32 %v388, %v618
  %624 = vmatprep.subr.bf16.mxu0 0
  %625 = vmatpush1.bf16.msra.mxu0 0
  %626 = vmatprep.subr.bf16.mxu0 0
  %627 = vmatpush1.bf16.msra.mxu0 0
  %628 = vmatprep.subr.bf16.mxu0 0
  %629 = vmatpush1.bf16.msra.mxu0 0
  %630 = vmatprep.subr.bf16.mxu0 0
  %631 = vmatpush1.bf16.msra.mxu0 0
  %632 = vmatprep.subr.bf16.mxu0 0
  %633 = vmatpush1.bf16.msra.mxu0 %v578
  %634 = vmatprep.subr.bf16.mxu0 0
  %635 = vmatpush1.bf16.msra.mxu0 %v577
  %636 = vmatprep.subr.bf16.mxu0 0
  %637 = vmatpush1.bf16.msra.mxu0 %v576
  %638 = vmatprep.subr.bf16.mxu0 0
  %639 = vmatpush1.bf16.msra.mxu0 %v575
  %640 = vmatprep.subr.bf16.mxu0 0
  %641 = vmatpush2.bf16.msra.mxu0 0
  %642 = vmatprep.subr.bf16.mxu0 0
  %643 = vmatpush2.bf16.msra.mxu0 0
  %644 = vmatprep.subr.bf16.mxu0 0
  %645 = vmatpush2.bf16.msra.mxu0 0
  %646 = vmatprep.subr.bf16.mxu0 0
  %647 = vmatpush2.bf16.msra.mxu0 0
  %648 = vmatprep.subr.bf16.mxu0 0
  %649 = vmatpush2.bf16.msra.mxu0 0
  %650 = vmatprep.subr.bf16.mxu0 0
  %651 = vmatpush2.bf16.msra.mxu0 0
  %652 = vmatprep.subr.bf16.mxu0 0
  %653 = vmatpush2.bf16.msra.mxu0 0
  %654 = vmatprep.subr.bf16.mxu0 0
  %655 = vmatpush2.bf16.msra.mxu0 0
  %656 = vmatprep.mubr.bf16.mxu0 0
  %657 = vmatmul.mubr.bf16.gmra.mxu0 %v394
  %v658 = vpop.f32.mrf.mxu0
  %v659 = vadd.f32 0.0, %v658
  %v660 = vpop.f32.mrf.mxu0
  %v661 = vpop.f32.mrf.mxu0
  %v662 = vpop.f32.mrf.mxu0
  %663 = vdwg.mxu0
  %v664 = vadd.f32 %v471, %v659
  %v665 = vmul.f32 %v623, %v558
  %666 = vadd.xlane.f32.xlu0 %v665
  %v667 = vpop.xlane.xlu0 %666
  %v668 = vmul.f32 %v664, %v558
  %669 = vadd.xlane.f32.xlu0 %v668
  %v670 = vpop.xlane.xlu0 %669
  %v671 = vsub.f32 0.0, %v670
  %v672 = vmin.f32 %v667, 0.0
  %v673 = vmin.f32 %v671, 0.0
  %v674 = vand.u32 2147483647, %v667
  %v675 = vand.u32 2147483647, %v671
  %v676 = vsub.f32 0.0, %v674
  %v677 = vsub.f32 0.0, %v675
  %v678 = vmul.f32 %v676, 1.442695
  %v679 = vpow.pop %v678
  %v680 = vmul.f32 %v677, 1.442695
  %v681 = vpow.pop %v680
  %v682 = vadd.f32 %v679, 1.0
  %v683 = vlog2.pop %v682
  %v684 = vmul.f32 %v683, 0.6931472
  %v685 = vmul.f32 -0.5, %v679
  %v686 = vadd.f32 %v685, 1.0
  %v687 = vmul.f32 %v686, %v679
  %v688 = vand.u32 2147483647, %v679
  %vm689 = vcmp.lt.f32.partialorder %v688, 0.0004427343
  %v690 = vsel %vm689, %v687, %v684
  %v691 = vadd.f32 %v681, 1.0
  %v692 = vlog2.pop %v691
  %v693 = vmul.f32 %v692, 0.6931472
  %v694 = vmul.f32 -0.5, %v681
  %v695 = vadd.f32 %v694, 1.0
  %v696 = vmul.f32 %v695, %v681
  %v697 = vand.u32 2147483647, %v681
  %vm698 = vcmp.lt.f32.partialorder %v697, 0.0004427343
  %v699 = vsel %vm698, %v696, %v693
  %v700 = vsub.f32 %v672, %v690
  %v701 = vsub.f32 %v673, %v699
  %v702 = vadd.f32 %v700, %v701
  %vm703 = vcmask 7168
  %704 = vst.msk [vmem:[%s5] sm:$0xff] %vm703, %v702
  // Predicated region
  $region22: #{skipgram_neg_forward.1} parent=0 // pred_check
    _
  $region23: #{skipgram_neg_forward.1} parent=0 // pred_check_branch
    %706 = sbr.rel (0) target = $region25
  $region24: #{skipgram_neg_forward.1} parent=0 // pred_region
    _
  $region25: #{skipgram_neg_forward.1} parent=0 // pred_fallthru
    _
  // Predicated region
  $region26: #{skipgram_neg_forward.1} parent=0 // pred_check
    _
  $region27: #{skipgram_neg_forward.1} parent=0 // pred_check_branch
    %708 = sbr.rel (0) target = $region29
  $region28: #{skipgram_neg_forward.1} parent=0 // pred_region
    _
  $region29: #{skipgram_neg_forward.1} parent=0 // pred_fallthru
    _

</llo_original>
